<compile_context>
chip_gen: v7x
topology: tpu7x:2x2x1
jax: 0.10.0
libtpu: 0.0.40
codegen_flags: <defaults>
</compile_context>

<pallas_src>
import functools

import jax
import jax.numpy as jnp
from jax.experimental import pallas as pl
from jax.experimental.pallas import tpu as pltpu


def u_correct_kernel(y_true_ref, y_pred_t_ref, theta_pinv_t_ref, counts_ref,
                     out_ref, s_bc_acc, *, bag_number: int,
                     gradient_ascent: float):
    pid = pl.program_id(0)

    # ---- accumulator init on the first N-tile ----
    @pl.when(pid == 0)
    def _init():
        s_bc_acc[...] = jnp.zeros_like(s_bc_acc)

    # ---- -log_softmax, lane-dense: classes on sublanes, samples on lanes ----
    logits = y_pred_t_ref[...]                                   # (C, TN) f32
    m = jnp.max(logits, axis=0, keepdims=True)                   # (1, TN)
    lse = m + jnp.log(jnp.sum(jnp.exp(logits - m), axis=0, keepdims=True))
    neg_lsm = lse - logits                                       # (C, TN)

    # ---- bag one-hot (bag-major): one_hot[b, n] = (y_true[n] == b) ----
    # Padded samples carry label == bag_number -> all-zero column -> no effect.
    labels = y_true_ref[...]                                     # (1, TN) int32
    bag_ids = jax.lax.broadcasted_iota(
        jnp.int32, (bag_number, labels.shape[1]), 0)             # (B, TN)
    one_hot_bn = (bag_ids == labels).astype(jnp.float32)         # (B, TN)

    # ---- per-bag, per-class NLL partial sums via one MXU matmul ----
    # Contract the lane (sample) axis of both operands: (B, TN) x (C, TN) -> (B, C)
    s_bc_acc[...] += jax.lax.dot_general(
        one_hot_bn, neg_lsm,
        dimension_numbers=(((1,), (1,)), ((), ())),
        preferred_element_type=jnp.float32)

    # ---- epilogue on the last N-tile ----
    @pl.when(pid == pl.num_programs(0) - 1)
    def _epilogue():
        counts = counts_ref[...]                                 # (B, 1) f32
        # CrossEntropyLoss(reduction='mean') per bag; empty bags keep risk 1.0
        ce = s_bc_acc[...] / jnp.maximum(counts, 1.0)            # (B, C)
        class_risk = jnp.where(counts > 0.0,
                               ce * theta_pinv_t_ref[...],       # theta^+[j,i] as (B, C)
                               1.0)                              # (B, C)
        risk_j = jnp.sum(class_risk, axis=0, keepdims=True)      # (1, C)
        risk_j = jnp.where(risk_j < 0.0, -risk_j * gradient_ascent, risk_j)
        out_ref[...] = jnp.sum(risk_j, axis=1, keepdims=True)    # (1, 1)


def u_correct(y_true, y_pred, theta, class_number: int, bag_number: int,
              gradient_ascent: float, *, tn: int = 2048):
    """Pallas U_correct. y_true: (N,) int, y_pred: (N, C), theta: (B, C)."""
    n, c = y_pred.shape
    assert c == class_number

    # pinv (SVD) stays in plain JAX; passed transposed as (B, C).
    theta_pinv = jnp.linalg.pinv(theta.astype(jnp.float32))      # (C, B)
    theta_pinv_t = jnp.transpose(theta_pinv)                     # (B, C)

    # Lane-dense layout + padding of the sample axis to a tile multiple.
    n_tiles = pl.cdiv(n, tn)
    n_pad = n_tiles * tn
    y_pred_t = jnp.zeros((c, n_pad), jnp.float32).at[:, :n].set(
        jnp.transpose(y_pred.astype(jnp.float32)))               # (C, n_pad)
    # Out-of-range labels (incl. padding label == bag_number) are silently
    # dropped, matching jax.nn.one_hot / the PyTorch scatter_ semantics.
    labels = jnp.full((1, n_pad), bag_number, jnp.int32).at[0, :n].set(
        y_true.astype(jnp.int32))                                # (1, n_pad)

    # Hoisted per-bag sample counts (loop-invariant, read only in epilogue).
    counts = jnp.sum(
        (y_true.astype(jnp.int32)[None, :]
         == jnp.arange(bag_number, dtype=jnp.int32)[:, None]).astype(jnp.float32),
        axis=1, keepdims=True)                                   # (B, 1)

    kernel = functools.partial(u_correct_kernel,
                               bag_number=bag_number,
                               gradient_ascent=float(gradient_ascent))

    cost = pl.CostEstimate(
        flops=int(2 * bag_number * n_pad * c + 8 * n_pad * c),
        transcendentals=int(n_pad * c + n_pad),
        bytes_accessed=int(n_pad * c * 4 + n_pad * 4
                           + bag_number * (c + 1) * 4 + 4),
    )

    out = pl.pallas_call(
        kernel,
        out_shape=jax.ShapeDtypeStruct((1, 1), jnp.float32),
        grid=(n_tiles,),
        in_specs=[
            pl.BlockSpec((1, tn), lambda i: (0, i)),             # labels (1, TN)
            pl.BlockSpec((c, tn), lambda i: (0, i)),             # y_pred^T (C, TN)
            pl.BlockSpec((bag_number, c), lambda i: (0, 0)),     # theta^+T (B, C)
            pl.BlockSpec((bag_number, 1), lambda i: (0, 0)),     # counts (B, 1)
        ],
        out_specs=pl.BlockSpec((1, 1), lambda i: (0, 0)),
        scratch_shapes=[pltpu.VMEM((bag_number, c), jnp.float32)],
        compiler_params=pltpu.CompilerParams(
            dimension_semantics=("arbitrary",)),
        cost_estimate=cost,
    )(labels, y_pred_t, theta_pinv_t, counts)
    return out[0, 0]


def u_correct_ref(y_true, y_pred, theta, bag_number, ga):
    """Pure-JAX reference mirroring the PyTorch loops."""
    theta_T = jnp.linalg.pinv(theta.astype(jnp.float32))         # (C, B)
    lsm = jax.nn.log_softmax(y_pred.astype(jnp.float32), axis=1)
    one_hot = jax.nn.one_hot(y_true, bag_number, dtype=jnp.float32)  # (N, B)
    counts = one_hot.sum(axis=0)                                 # (B,)
    s_bc = -(one_hot.T @ lsm)                                    # (B, C)
    ce = s_bc / jnp.maximum(counts[:, None], 1.0)
    class_risk = jnp.where(counts[:, None] > 0, ce * theta_T.T, 1.0)
    risk_j = class_risk.sum(axis=0)
    risk_j = jnp.where(risk_j < 0, -risk_j * ga, risk_j)
    return risk_j.sum()


if __name__ == "__main__":
    CLASS_NUMBER = 4
    BAG_NUMBER = 6
    GRADIENT_ASCENT = 0.5

    key = jax.random.PRNGKey(0)
    k_theta, k_pred1, k_true1, k_pred2, k_true2 = jax.random.split(key, 5)

    # theta: (Bag_Number, Class_Number) so pinv(theta) is (Class_Number, Bag_Number)
    theta = jax.random.normal(k_theta, (BAG_NUMBER, CLASS_NUMBER), dtype=jnp.float32)

    # --- Test 1: tiny, single grid tile; bag (B-1) kept empty to exercise
    #     the "empty bag keeps class_risk = 1.0" path. ---
    n1 = 16
    y_pred1 = jax.random.normal(k_pred1, (n1, CLASS_NUMBER), dtype=jnp.float32)
    y_true1 = jax.random.randint(k_true1, (n1,), 0, BAG_NUMBER - 1, dtype=jnp.int32)
    out1 = u_correct(y_true1, y_pred1, theta, CLASS_NUMBER, BAG_NUMBER,
                     GRADIENT_ASCENT, tn=128)
    jax.block_until_ready(out1)
    ref1 = u_correct_ref(y_true1, y_pred1, theta, BAG_NUMBER, GRADIENT_ASCENT)
    assert bool(jnp.allclose(out1, ref1, rtol=1e-4, atol=1e-4)), (out1, ref1)

    # --- Test 2: multi-tile grid over N (N=300 -> 3 tiles of 128 with padding),
    #     exercising the VMEM accumulator across grid steps. ---
    n2 = 300
    y_pred2 = jax.random.normal(k_pred2, (n2, CLASS_NUMBER), dtype=jnp.float32)
    y_true2 = jax.random.randint(k_true2, (n2,), 0, BAG_NUMBER, dtype=jnp.int32)
    out2 = u_correct(y_true2, y_pred2, theta, CLASS_NUMBER, BAG_NUMBER,
                     GRADIENT_ASCENT, tn=128)
    jax.block_until_ready(out2)
    ref2 = u_correct_ref(y_true2, y_pred2, theta, BAG_NUMBER, GRADIENT_ASCENT)
    assert bool(jnp.allclose(out2, ref2, rtol=1e-4, atol=1e-4)), (out2, ref2)

    print("KERNEL_OK")
</pallas_src>

<mosaic_0001>
module attributes {stable_mosaic.version = 11 : i64} {
  func.func @u_correct_kernel(%arg0: i32, %arg1: memref<1x128xi32, #tpu.memory_space<vmem>>, %arg2: memref<4x128xf32, #tpu.memory_space<vmem>>, %arg3: memref<6x4xf32, #tpu.memory_space<vmem>>, %arg4: memref<6x1xf32, #tpu.memory_space<vmem>>, %arg5: memref<1x1xf32, #tpu.memory_space<vmem>>, %arg6: memref<6x4xf32, #tpu.memory_space<vmem>>) attributes {dimension_semantics = [#tpu.dimension_semantics<arbitrary>], iteration_bounds = array<i64: 1>, scalar_prefetch = 0 : i64, scratch_operands = 1 : i64, tpu.core_type = #tpu.core_type<tc>, window_params = [{transform_indices = @transform_0, window_bounds = array<i64: 1, 128>}, {transform_indices = @transform_1, window_bounds = array<i64: 4, 128>}, {pipeline_mode = #tpu.pipeline_mode<synchronous>, transform_indices = @transform_2, window_bounds = array<i64: 6, 4>}, {pipeline_mode = #tpu.pipeline_mode<synchronous>, transform_indices = @transform_3, window_bounds = array<i64: 6, 1>}, {pipeline_mode = #tpu.pipeline_mode<synchronous>, transform_indices = @transform_4, window_bounds = array<i64: 1, 1>}]} {
    %c0_i32 = arith.constant 0 : i32
    %0 = arith.cmpi eq, %arg0, %c0_i32 : i32
    %1 = arith.extui %0 : i1 to i32
    %c0_i32_0 = arith.constant 0 : i32
    %2 = arith.cmpi ne, %1, %c0_i32_0 : i32
    scf.if %2 {
      %cst_12 = arith.constant 0.000000e+00 : f32
      %28 = vector.broadcast %cst_12 : f32 to vector<6x4xf32>
      %c0_13 = arith.constant 0 : index
      %c0_14 = arith.constant 0 : index
      %29 = vector.load %arg6[%c0_13, %c0_14] : memref<6x4xf32, #tpu.memory_space<vmem>>, vector<6x4xf32>
      tpu.vector_store %arg6[%c0_13, %c0_14], %28 {strides = array<i32>} : memref<6x4xf32, #tpu.memory_space<vmem>>, vector<6x4xf32>,
    } else {
    }
    %c0 = arith.constant 0 : index
    %c0_1 = arith.constant 0 : index
    %3 = vector.load %arg2[%c0, %c0_1] : memref<4x128xf32, #tpu.memory_space<vmem>>, vector<4x128xf32>
    %cst = arith.constant dense<0xFF800000> : vector<128xf32>
    %4 = vector.multi_reduction <maximumf>, %3, %cst [0] : vector<4x128xf32> to vector<128xf32>
    %5 = vector.shape_cast %4 : vector<128xf32> to vector<1x128xf32>
    %6 = vector.broadcast %5 : vector<1x128xf32> to vector<4x128xf32>
    %7 = arith.subf %3, %6 : vector<4x128xf32>
    %8 = math.exp %7 : vector<4x128xf32>
    %cst_2 = arith.constant dense<0.000000e+00> : vector<128xf32>
    %9 = vector.multi_reduction <add>, %8, %cst_2 [0] : vector<4x128xf32> to vector<128xf32>
    %10 = vector.shape_cast %9 : vector<128xf32> to vector<1x128xf32>
    %11 = math.log %10 : vector<1x128xf32>
    %12 = arith.addf %5, %11 : vector<1x128xf32>
    %13 = vector.broadcast %12 : vector<1x128xf32> to vector<4x128xf32>
    %14 = arith.subf %13, %3 : vector<4x128xf32>
    %c0_3 = arith.constant 0 : index
    %c0_4 = arith.constant 0 : index
    %15 = vector.load %arg1[%c0_3, %c0_4] : memref<1x128xi32, #tpu.memory_space<vmem>>, vector<1x128xi32>
    %16 = tpu.iota {dimensions = array<i32: 0>} : vector<6x128xi32>
    %17 = vector.broadcast %15 : vector<1x128xi32> to vector<6x128xi32>
    %18 = arith.cmpi eq, %16, %17 : vector<6x128xi32>
    %19 = arith.extui %18 : vector<6x128xi1> to vector<6x128xi32>
    %20 = arith.sitofp %19 : vector<6x128xi32> to vector<6x128xf32>
    %c0_5 = arith.constant 0 : index
    %c0_6 = arith.constant 0 : index
    %21 = vector.load %arg6[%c0_5, %c0_6] : memref<6x4xf32, #tpu.memory_space<vmem>>, vector<6x4xf32>
    %cst_7 = arith.constant dense<0.000000e+00> : vector<6x4xf32>
    %22 = tpu.matmul %20, %14, %cst_7 {dimension_numbers = #tpu.dot_dimension_numbers<[1], [1], [0], [0], [0, 0, 1, 0], [], []>} : vector<6x128xf32>, vector<4x128xf32>, vector<6x4xf32> -> vector<6x4xf32>
    %23 = arith.addf %21, %22 : vector<6x4xf32>
    %c0_8 = arith.constant 0 : index
    %c0_9 = arith.constant 0 : index
    %24 = vector.load %arg6[%c0_8, %c0_9] : memref<6x4xf32, #tpu.memory_space<vmem>>, vector<6x4xf32>
    tpu.vector_store %arg6[%c0_8, %c0_9], %23 {strides = array<i32>} : memref<6x4xf32, #tpu.memory_space<vmem>>, vector<6x4xf32>,
    %c0_i32_10 = arith.constant 0 : i32
    %25 = arith.cmpi eq, %arg0, %c0_i32_10 : i32
    %26 = arith.extui %25 : i1 to i32
    %c0_i32_11 = arith.constant 0 : i32
    %27 = arith.cmpi ne, %26, %c0_i32_11 : i32
    scf.if %27 {
      %c0_12 = arith.constant 0 : index
      %c0_13 = arith.constant 0 : index
      %28 = vector.load %arg4[%c0_12, %c0_13] : memref<6x1xf32, #tpu.memory_space<vmem>>, vector<6x1xf32>
      %c0_14 = arith.constant 0 : index
      %c0_15 = arith.constant 0 : index
      %29 = vector.load %arg6[%c0_14, %c0_15] : memref<6x4xf32, #tpu.memory_space<vmem>>, vector<6x4xf32>
      %cst_16 = arith.constant 1.000000e+00 : f32
      %30 = vector.broadcast %cst_16 : f32 to vector<6x1xf32>
      %31 = arith.maximumf %28, %30 : vector<6x1xf32>
      %32 = vector.broadcast %31 : vector<6x1xf32> to vector<6x4xf32>
      %33 = arith.divf %29, %32 : vector<6x4xf32>
      %cst_17 = arith.constant 0.000000e+00 : f32
      %34 = vector.broadcast %cst_17 : f32 to vector<6x1xf32>
      %35 = arith.cmpf ogt, %28, %34 : vector<6x1xf32>
      %c0_18 = arith.constant 0 : index
      %c0_19 = arith.constant 0 : index
      %36 = vector.load %arg3[%c0_18, %c0_19] : memref<6x4xf32, #tpu.memory_space<vmem>>, vector<6x4xf32>
      %37 = arith.mulf %33, %36 : vector<6x4xf32>
      %cst_20 = arith.constant 1.000000e+00 : f32
      %38 = vector.shape_cast %35 : vector<6x1xi1> to vector<6x1xi1>
      %39 = vector.broadcast %38 : vector<6x1xi1> to vector<6x4xi1>
      %40 = vector.broadcast %cst_20 : f32 to vector<6x4xf32>
      %41 = arith.select %39, %37, %40 : vector<6x4xi1>, vector<6x4xf32>
      %cst_21 = arith.constant dense<0.000000e+00> : vector<4xf32>
      %42 = vector.multi_reduction <add>, %41, %cst_21 [0] : vector<6x4xf32> to vector<4xf32>
      %43 = vector.shape_cast %42 : vector<4xf32> to vector<1x4xf32>
      %cst_22 = arith.constant 0.000000e+00 : f32
      %44 = vector.broadcast %cst_22 : f32 to vector<1x4xf32>
      %45 = arith.cmpf olt, %43, %44 : vector<1x4xf32>
      %cst_23 = arith.constant 0.000000e+00 : f32
      %46 = vector.broadcast %cst_23 : f32 to vector<1x4xf32>
      %47 = arith.subf %46, %43 : vector<1x4xf32>
      %cst_24 = arith.constant 5.000000e-01 : f32
      %48 = vector.broadcast %cst_24 : f32 to vector<1x4xf32>
      %49 = arith.mulf %47, %48 : vector<1x4xf32>
      %50 = arith.select %45, %49, %43 : vector<1x4xi1>, vector<1x4xf32>
      %cst_25 = arith.constant dense<0.000000e+00> : vector<1xf32>
      %51 = vector.multi_reduction <add>, %50, %cst_25 [1] : vector<1x4xf32> to vector<1xf32>
      %52 = vector.shape_cast %51 : vector<1xf32> to vector<1x1xf32>
      %c0_26 = arith.constant 0 : index
      %c0_27 = arith.constant 0 : index
      %53 = vector.load %arg5[%c0_26, %c0_27] : memref<1x1xf32, #tpu.memory_space<vmem>>, vector<1x1xf32>
      tpu.vector_store %arg5[%c0_26, %c0_27], %52 {strides = array<i32>} : memref<1x1xf32, #tpu.memory_space<vmem>>, vector<1x1xf32>,
    } else {
    }
    return
  }
  func.func @transform_0(%arg0: i32) -> (i32, i32) {
    %c0_i32 = arith.constant 0 : i32
    %c0_i32_0 = arith.constant 0 : i32
    return %c0_i32, %arg0 : i32, i32
  }
  func.func @transform_1(%arg0: i32) -> (i32, i32) {
    %c0_i32 = arith.constant 0 : i32
    %c0_i32_0 = arith.constant 0 : i32
    return %c0_i32, %arg0 : i32, i32
  }
  func.func @transform_2(%arg0: i32) -> (i32, i32) {
    %c0_i32 = arith.constant 0 : i32
    %c0_i32_0 = arith.constant 0 : i32
    %c0_i32_1 = arith.constant 0 : i32
    return %c0_i32, %c0_i32_0 : i32, i32
  }
  func.func @transform_3(%arg0: i32) -> (i32, i32) {
    %c0_i32 = arith.constant 0 : i32
    %c0_i32_0 = arith.constant 0 : i32
    %c0_i32_1 = arith.constant 0 : i32
    return %c0_i32, %c0_i32_0 : i32, i32
  }
  func.func @transform_4(%arg0: i32) -> (i32, i32) {
    %c0_i32 = arith.constant 0 : i32
    %c0_i32_0 = arith.constant 0 : i32
    %c0_i32_1 = arith.constant 0 : i32
    return %c0_i32, %c0_i32_0 : i32, i32
  }
}

</mosaic_0001>

<llo_original>
// kernel: tpu_custom_call.1
$region0: #{tpu_custom_call.1}
  #allocation0 [shape = 'u32[]', space=smem, size = 0x4, offset = 0x4, fixed_abs, tag = 'smem constant byte address 0x4 - core index']
  #allocation1 [shape = 'u32[144,128]{1,0:T(1,128)}', space=vmem, size = 0x12000, scoped, tag = 'internal scratch']
  #allocation2 [shape = 'f32[6,4]{1,0:T(8,128)}', space=vmem, size = 0x1000, scoped, tag = 'scratch operand']
  %s0 = inlined_call_operand.vmem [shape: s32[1,128], index: 0, kind: input, shape index: {}]
  %s1 = inlined_call_operand.vmem [shape: f32[4,128], index: 1, kind: input, shape index: {}]
  %s2 = inlined_call_operand.vmem [shape: f32[6,4], index: 2, kind: input, shape index: {}]
  %s3 = inlined_call_operand.vmem [shape: f32[6,1], index: 3, kind: input, shape index: {}]
  %s4 = inlined_call_operand.hbm [shape: f32[1,1], index: 4, kind: output, shape index: {}]
  %s5 = sld [smem:[#allocation0]]
  $region34: #{tpu_custom_call.1} parent=0
    _
  %s7 = ssub.s32 1, %s5
  %s8 = scalar_select 0, %s7, %s5
  $region1: #{tpu_custom_call.1} parent=0
    #allocation3 [shape = 'u8[512]{0}', space=vmem, size = 0x400, scoped, tag = 'output window, operand 0, single buffered']
    #allocation4 [shape = 's32[1]{0}', space=sflag, size = 0x4, scoped, tag = 'scoped memory for tpu_custom_call.1']
    %9 = vsyncpa [#allocation4], 0
    // Predicated region
    $region2: #{tpu_custom_call.1} parent=1 // pred_check
      _
    $region3: #{tpu_custom_call.1} parent=1 // pred_check_branch
      %11 = sbr.rel (0) target = $region5
    $region4: #{tpu_custom_call.1} parent=1 // pred_region
      _
    $region5: #{tpu_custom_call.1} parent=1 // pred_fallthru
      _
    // Predicated region
    $region6: #{tpu_custom_call.1} parent=1 // pred_check
      _
    $region7: #{tpu_custom_call.1} parent=1 // pred_check_branch
      %13 = sbr.rel (0) target = $region9
    $region8: #{tpu_custom_call.1} parent=1 // pred_region
      _
    $region9: #{tpu_custom_call.1} parent=1 // pred_fallthru
      _
    // Predicated region
    $region10: #{tpu_custom_call.1} parent=1 // pred_check
      _
    $region11: #{tpu_custom_call.1} parent=1 // pred_check_branch
      %15 = sbr.rel (0) target = $region13
    $region12: #{tpu_custom_call.1} parent=1 // pred_region
      _
    $region13: #{tpu_custom_call.1} parent=1 // pred_fallthru
      _
    // Predicated region
    $region14: #{tpu_custom_call.1} parent=1 // pred_check
      _
    $region15: #{tpu_custom_call.1} parent=1 // pred_check_branch
      %17 = sbr.rel (0) target = $region17
    $region16: #{tpu_custom_call.1} parent=1 // pred_region
      _
    $region17: #{tpu_custom_call.1} parent=1 // pred_fallthru
      _
    %p18 = scmp.eq.s32.totalorder 0, 0
    // Predicated region
    $region18: #{tpu_custom_call.1} parent=1 // pred_check
      %p19 = pneg %p18
    $region19: #{tpu_custom_call.1} parent=1 // pred_check_branch
      %21 = sbr.rel (%p19) target = $region21
    $region20: #{tpu_custom_call.1} parent=1 // pred_region
      %vm22 = vcmask 29696
      %23 = vst.msk [vmem:[#allocation2] sm:$0x3f] %vm22, 0.0
    $region21: #{tpu_custom_call.1} parent=1 // pred_fallthru
      _
    %v24 = vld [vmem:[%s1] sm:$0xf]
    %vm25 = vcmask 1043456
    %v26 = vsel %vm25, %v24, -inf
    %v27 = vrot.slane %v26, 4
    %v28 = vmax.f32 %v26, %v27
    %v29 = vrot.slane %v28, 2
    %v30 = vmax.f32 %v28, %v29
    %v31 = vrot.slane %v30, 1
    %v32 = vmax.f32 %v30, %v31
    %v33 = vsub.f32 %v24, %v32
    %v34 = vmul.f32 %v33, 1.442695
    %v35 = vpow.pop %v34
    %v36 = vsel %vm25, %v35, 0.0
    %v37 = vrot.slane %v36, 4
    %v38 = vadd.f32 %v36, %v37
    %v39 = vrot.slane %v38, 2
    %v40 = vadd.f32 %v38, %v39
    %v41 = vrot.slane %v40, 1
    %v42 = vadd.f32 %v40, %v41
    %v43 = vlog2.pop %v42
    %v44 = vmul.f32 %v43, 0.6931472
    %v45 = vadd.f32 %v32, %v44
    %v46 = vsub.f32 %v45, %v24
    %v47 = vld [vmem:[%s0] sm:$0x1]
    %v48 = vlaneseq
    %v49 = vshrl.u32 %v48, 7
    %v50 = vlaneseq
    %v51 = vshrl.u32 %v50, 7
    %v52 = vsub.s32 0, %v51
    %v53 = vrot.slane %v47, %v52
    %vm54 = vcmp.eq.s32.totalorder %v49, %v53
    %v55 = vsel %vm54, 1, 0
    %v56 = vcvt.s32.f32 %v55
    %v57 = vld [vmem:[#allocation2] sm:$0x3f]
    %58 = vmatprep.subr.mxu0 0.0
    %59 = vmatpush1.xpose.msra.mxu0 %v46
    %60 = vmatprep.subr.mxu0 0.0
    %61 = vmatpush1.xpose.msra.mxu0 0.0
    %62 = vmatprep.subr.mxu0 0.0
    %63 = vmatpush1.xpose.msra.mxu0 0.0
    %64 = vmatprep.subr.mxu0 0.0
    %65 = vmatpush1.xpose.msra.mxu0 0.0
    %66 = vmatprep.subr.mxu0 0.0
    %67 = vmatpush1.xpose.msra.mxu0 0.0
    %68 = vmatprep.subr.mxu0 0.0
    %69 = vmatpush1.xpose.msra.mxu0 0.0
    %70 = vmatprep.subr.mxu0 0.0
    %71 = vmatpush1.xpose.msra.mxu0 0.0
    %72 = vmatprep.subr.mxu0 0.0
    %73 = vmatpush1.xpose.msra.mxu0 0.0
    %74 = vmatprep.subr.mxu0 0.0
    %75 = vmatpush1.xpose.msra.mxu0 0.0
    %76 = vmatprep.subr.mxu0 0.0
    %77 = vmatpush1.xpose.msra.mxu0 0.0
    %78 = vmatprep.subr.mxu0 0.0
    %79 = vmatpush1.xpose.msra.mxu0 0.0
    %80 = vmatprep.subr.mxu0 0.0
    %81 = vmatpush1.xpose.msra.mxu0 0.0
    %82 = vmatprep.subr.mxu0 0.0
    %83 = vmatpush1.xpose.msra.mxu0 0.0
    %84 = vmatprep.subr.mxu0 0.0
    %85 = vmatpush1.xpose.msra.mxu0 0.0
    %86 = vmatprep.subr.mxu0 0.0
    %87 = vmatpush1.xpose.msra.mxu0 0.0
    %88 = vmatprep.subr.mxu0 0.0
    %89 = vmatpush1.xpose.msra.mxu0 0.0
    %90 = vmatprep.subr.mxu0 0.0
    %91 = vmatpush1.xpose.msra.mxu0 0.0
    %92 = vmatprep.subr.mxu0 0.0
    %93 = vmatpush1.xpose.msra.mxu0 0.0
    %94 = vmatprep.subr.mxu0 0.0
    %95 = vmatpush1.xpose.msra.mxu0 0.0
    %96 = vmatprep.subr.mxu0 0.0
    %97 = vmatpush1.xpose.msra.mxu0 0.0
    %98 = vmatprep.subr.mxu0 0.0
    %99 = vmatpush1.xpose.msra.mxu0 0.0
    %100 = vmatprep.subr.mxu0 0.0
    %101 = vmatpush1.xpose.msra.mxu0 0.0
    %102 = vmatprep.subr.mxu0 0.0
    %103 = vmatpush1.xpose.msra.mxu0 0.0
    %104 = vmatprep.subr.mxu0 0.0
    %105 = vmatpush1.xpose.msra.mxu0 0.0
    %106 = vmatprep.subr.mxu0 0.0
    %107 = vmatpush1.xpose.msra.mxu0 0.0
    %108 = vmatprep.subr.mxu0 0.0
    %109 = vmatpush1.xpose.msra.mxu0 0.0
    %110 = vmatprep.subr.mxu0 0.0
    %111 = vmatpush1.xpose.msra.mxu0 0.0
    %112 = vmatprep.subr.mxu0 0.0
    %113 = vmatpush1.xpose.msra.mxu0 0.0
    %114 = vmatprep.subr.mxu0 0.0
    %115 = vmatpush1.xpose.msra.mxu0 0.0
    %116 = vmatprep.subr.mxu0 0.0
    %117 = vmatpush1.xpose.msra.mxu0 0.0
    %118 = vmatprep.subr.mxu0 0.0
    %119 = vmatpush1.xpose.msra.mxu0 0.0
    %120 = vmatprep.subr.mxu0 0.0
    %121 = vmatpush1.xpose.msra.mxu0 0.0
    %122 = vmatprep.mubr.f32.mxu0 0.0
    %123 = vmatmul.mubr.f32.gmra.mrb[0].mxu0 %v56
    %v124 = vpop.f32.mrb[0].mxu0
    %v125 = vadd.f32 0.0, %v124
    %v126 = vpop.f32.mrb[0].mxu0
    %127 = vdwg.mxu0
    %v128 = vadd.f32 %v57, %v125
    %vm129 = vcmask 29696
    %130 = vst.msk [vmem:[#allocation2] sm:$0x3f] %vm129, %v128
    // Predicated region
    $region22: #{tpu_custom_call.1} parent=1 // pred_check
      %p131 = pneg %p18
    $region23: #{tpu_custom_call.1} parent=1 // pred_check_branch
      %133 = sbr.rel (%p131) target = $region25
    $region24: #{tpu_custom_call.1} parent=1 // pred_region
      %v134 = vld [vmem:[%s3] sm:$0x3f]
      %v135 = vld [vmem:[#allocation2] sm:$0x3f]
      %v136 = vmax.f32 %v134, 1.0
      %138 = vset.pattern.permute.xlu0 0
      %139 = vperm.xlu0 %138, %v136
      %v140 = vpop.permute.xlu0 %139
      %v142 = vrcp.pop %v140
      %v143 = vmul.f32 %v135, %v142
      %vm144 = vcmp.gt.f32.partialorder %v134, 0.0
      %v145 = vld [vmem:[%s2] sm:$0x3f]
      %v146 = vmul.f32 %v143, %v145
      %v147 = vsel %vm144, 1, 0
      %148 = vset.pattern.permute.xlu0 0
      %149 = vperm.xlu0 %148, %v147
      %v150 = vpop.permute.xlu0 %149
      %vm151 = vcmp.eq.s32.totalorder %v150, 1
      %v152 = vsel %vm151, %v146, 1.0
      %v153 = vsel %vm129, %v152, 0.0
      %v154 = vrot.slane %v153, 4
      %v155 = vadd.f32 %v153, %v154
      %v156 = vrot.slane %v155, 2
      %v157 = vadd.f32 %v155, %v156
      %v158 = vrot.slane %v157, 1
      %v159 = vadd.f32 %v157, %v158
      %vm160 = vcmp.lt.f32.partialorder %v159, 0.0
      %v161 = vsub.f32 0.0, %v159
      %v162 = vmul.f32 %v161, 0.5
      %v163 = vsel %vm160, %v162, %v159
      %vm164 = vcmask 31744
      %v165 = vsel %vm164, %v163, 0.0
      %166 = vadd.xlane.f32.xlu0 %v165
      %v167 = vpop.xlane.xlu0 %166
      %vm168 = vcmask 0
      %169 = vst.msk [vmem:[#allocation3] sm:$0x1] %vm168, %v167
    $region25: #{tpu_custom_call.1} parent=1 // pred_fallthru
      _
    // Predicated region
    $region26: #{tpu_custom_call.1} parent=1 // pred_check
      _
    $region27: #{tpu_custom_call.1} parent=1 // pred_check_branch
      %171 = sbr.rel (0) target = $region29
    $region28: #{tpu_custom_call.1} parent=1 // pred_region
      %s173 = ssub.s32 16, 16
      %174 = vsyncadd [#allocation4], %s173
      %s176 = sshll.u32 [#allocation3], 4
      %s177 = int_to_ptr.vmem [resolvable:$true] %s176
      %179 = dma.vmem_to_hbm [thread:$0]  %s177, 16, %s4, [#allocation4]
    $region29: #{tpu_custom_call.1} parent=1 // pred_fallthru
      _
    // Predicated region
    $region30: #{tpu_custom_call.1} parent=1 // pred_check
      _
    $region31: #{tpu_custom_call.1} parent=1 // pred_check_branch
      %181 = sbr.rel (0) target = $region33
    $region32: #{tpu_custom_call.1} parent=1 // pred_region
      %182 = dma.done [#allocation4], 16
    $region33: #{tpu_custom_call.1} parent=1 // pred_fallthru
      _
    %183 = vsyncpa [#allocation4], 1

</llo_original>
